<compile_context>
chip_gen: v5e
topology: v5e:2x2
jax: 0.10.0
libtpu: 0.0.40
codegen_flags: <defaults>
</compile_context>

<pallas_src>
import jax
import jax.numpy as jnp
from jax.experimental import pallas as pl
from jax.experimental.pallas import tpu as pltpu  # noqa: F401  (TPU-specific tuning hooks)


def _add_kernel(a_ref, b_ref, o_ref):
    o_ref[...] = a_ref[...] + b_ref[...]


def pallas_add(x211, x219):
    assert x211.shape == x219.shape and x211.dtype == x219.dtype
    orig_shape = x211.shape
    dtype = x211.dtype

    total = 1
    for d in orig_shape:
        total *= d

    a_flat = x211.reshape(total)
    b_flat = x219.reshape(total)

    # Lane-dense 2D view with all 8 sublanes lit.  Pad the flat length up to a
    # multiple of 8 if needed (never fall back to a (1, N) view); for the
    # module's 19600-element buffer this is a no-op (19600 % 8 == 0).
    rows = 8
    pad = (-total) % rows
    if pad:
        a_flat = jnp.pad(a_flat, (0, pad))
        b_flat = jnp.pad(b_flat, (0, pad))
    padded = total + pad
    cols = padded // rows

    a2d = a_flat.reshape(rows, cols)
    b2d = b_flat.reshape(rows, cols)

    itemsize = jnp.dtype(dtype).itemsize
    out2d = pl.pallas_call(
        _add_kernel,
        out_shape=jax.ShapeDtypeStruct((rows, cols), dtype),
        in_specs=[
            # block_shape == full array dims -> exempt from the (8,128) rule,
            # single block, no grid (whole array resident in VMEM).
            pl.BlockSpec((rows, cols), lambda: (0, 0)),
            pl.BlockSpec((rows, cols), lambda: (0, 0)),
        ],
        out_specs=pl.BlockSpec((rows, cols), lambda: (0, 0)),
        # Tiny, purely memory-bound op: hint the XLA scheduler accordingly.
        cost_estimate=pl.CostEstimate(
            flops=padded,
            transcendentals=0,
            bytes_accessed=3 * padded * itemsize,
        ),
    )(a2d, b2d)

    out_flat = out2d.reshape(padded)
    if pad:
        out_flat = out_flat[:total]
    return out_flat.reshape(orig_shape)


if __name__ == "__main__":
    key = jax.random.PRNGKey(0)
    k1, k2 = jax.random.split(key)
    # shapes from the module's forward: [1, 400, 7, 7]
    x211 = jax.random.normal(k1, (1, 400, 7, 7), dtype=jnp.float32)
    x219 = jax.random.normal(k2, (1, 400, 7, 7), dtype=jnp.float32)

    ref = x211 + x219
    jax.block_until_ready(ref)

    out = pallas_add(x211, x219)
    jax.block_until_ready(out)

    assert out.shape == (1, 400, 7, 7)
    assert jnp.allclose(out, ref, atol=1e-6), "mismatch vs reference add"

    print("KERNEL_OK")
</pallas_src>

<mosaic_0001>
module attributes {stable_mosaic.version = 11 : i64} {
  func.func @_add_kernel(%arg0: memref<8x2450xf32, #tpu.memory_space<vmem>>, %arg1: memref<8x2450xf32, #tpu.memory_space<vmem>>, %arg2: memref<8x2450xf32, #tpu.memory_space<vmem>>) attributes {dimension_semantics = [], scalar_prefetch = 0 : i64, scratch_operands = 0 : i64, tpu.core_type = #tpu.core_type<tc>} {
    %c0 = arith.constant 0 : index
    %c0_0 = arith.constant 0 : index
    %0 = vector.load %arg0[%c0, %c0_0] : memref<8x2450xf32, #tpu.memory_space<vmem>>, vector<8x2450xf32>
    %c0_1 = arith.constant 0 : index
    %c0_2 = arith.constant 0 : index
    %1 = vector.load %arg1[%c0_1, %c0_2] : memref<8x2450xf32, #tpu.memory_space<vmem>>, vector<8x2450xf32>
    %2 = arith.addf %0, %1 : vector<8x2450xf32>
    %c0_3 = arith.constant 0 : index
    %c0_4 = arith.constant 0 : index
    %3 = vector.load %arg2[%c0_3, %c0_4] : memref<8x2450xf32, #tpu.memory_space<vmem>>, vector<8x2450xf32>
    tpu.vector_store %arg2[%c0_3, %c0_4], %2 {strides = array<i32>} : memref<8x2450xf32, #tpu.memory_space<vmem>>, vector<8x2450xf32>,
    return
  }
}

</mosaic_0001>

<llo_original>
// kernel: tpu_custom_call.1
$region0: #{tpu_custom_call.1}
  #allocation0 [shape = 'u32[]', space=smem, size = 0x4, offset = 0x4, fixed_abs, tag = 'smem constant byte address 0x4 - core index']
  #allocation1 [shape = 'u32[72,128]{1,0:T(1,128)}', space=vmem, size = 0x9000, scoped, tag = 'internal scratch']
  %s0 = inlined_call_operand.hbm [shape: f32[8,2450], index: 0, kind: input, shape index: {}]
  %s1 = inlined_call_operand.hbm [shape: f32[8,2450], index: 1, kind: input, shape index: {}]
  %s2 = inlined_call_operand.hbm [shape: f32[8,2450], index: 2, kind: output, shape index: {}]
  %s3 = sld [smem:[#allocation0]]
  $region26: #{tpu_custom_call.1} parent=0
    _
  %s5 = ssub.s32 1, %s3
  %s6 = scalar_select 0, %s5, %s3
  $region1: #{tpu_custom_call.1} parent=0
    #allocation2 [shape = 'u8[81920]{0}', space=vmem, size = 0x14000, scoped, tag = 'input window, operand 0, single buffered']
    #allocation3 [shape = 's32[1]{0}', space=sflag, size = 0x4, scoped, tag = 'scoped memory for tpu_custom_call.1']
    #allocation4 [shape = 's32[1]{0}', space=sflag, size = 0x4, scoped, tag = 'scoped memory for tpu_custom_call.1']
    #allocation5 [shape = 'u8[81920]{0}', space=vmem, size = 0x14000, scoped, tag = 'input window, operand 1, single buffered']
    #allocation6 [shape = 's32[1]{0}', space=sflag, size = 0x4, scoped, tag = 'scoped memory for tpu_custom_call.1']
    #allocation7 [shape = 'u8[81920]{0}', space=vmem, size = 0x14000, scoped, tag = 'output window, operand 0, single buffered']
    %7 = vsyncpa [#allocation3], 0
    %8 = vsyncpa [#allocation6], 0
    %9 = vsyncpa [#allocation4], 0
    // Predicated region
    $region2: #{tpu_custom_call.1} parent=1 // pred_check
      _
    $region3: #{tpu_custom_call.1} parent=1 // pred_check_branch
      %11 = sbr.rel (0) target = $region5
    $region4: #{tpu_custom_call.1} parent=1 // pred_region
      %13 = vsyncadd [#allocation3], 0
      %s15 = sshll.u32 %s0, 4
      %s16 = int_to_ptr.hbm [resolvable:$true] %s15
      %s17 = sshll.u32 [#allocation2], 4
      %s18 = int_to_ptr.vmem [resolvable:$true] %s17
      %20 = dma.hbm_to_vmem [thread:$0]  %s16, 2560, %s18, [#allocation3]
    $region5: #{tpu_custom_call.1} parent=1 // pred_fallthru
      _
    // Predicated region
    $region6: #{tpu_custom_call.1} parent=1 // pred_check
      _
    $region7: #{tpu_custom_call.1} parent=1 // pred_check_branch
      %22 = sbr.rel (0) target = $region9
    $region8: #{tpu_custom_call.1} parent=1 // pred_region
      %24 = vsyncadd [#allocation6], 0
      %s26 = sshll.u32 %s1, 4
      %s27 = int_to_ptr.hbm [resolvable:$true] %s26
      %s28 = sshll.u32 [#allocation5], 4
      %s29 = int_to_ptr.vmem [resolvable:$true] %s28
      %31 = dma.hbm_to_vmem [thread:$0]  %s27, 2560, %s29, [#allocation6]
    $region9: #{tpu_custom_call.1} parent=1 // pred_fallthru
      _
    // Predicated region
    $region10: #{tpu_custom_call.1} parent=1 // pred_check
      _
    $region11: #{tpu_custom_call.1} parent=1 // pred_check_branch
      %33 = sbr.rel (0) target = $region13
    $region12: #{tpu_custom_call.1} parent=1 // pred_region
      %35 = dma.done [#allocation3], 2560
    $region13: #{tpu_custom_call.1} parent=1 // pred_fallthru
      _
    // Predicated region
    $region14: #{tpu_custom_call.1} parent=1 // pred_check
      _
    $region15: #{tpu_custom_call.1} parent=1 // pred_check_branch
      %37 = sbr.rel (0) target = $region17
    $region16: #{tpu_custom_call.1} parent=1 // pred_region
      %39 = dma.done [#allocation6], 2560
    $region17: #{tpu_custom_call.1} parent=1 // pred_fallthru
      _
    %v40 = vld [vmem:[#allocation2] sm:$0xff]
    %v41 = vld [vmem:[#allocation2 + $0x8] sm:$0xff]
    %v42 = vld [vmem:[#allocation2 + $0x10] sm:$0xff]
    %v43 = vld [vmem:[#allocation2 + $0x18] sm:$0xff]
    %v44 = vld [vmem:[#allocation2 + $0x20] sm:$0xff]
    %v45 = vld [vmem:[#allocation2 + $0x28] sm:$0xff]
    %v46 = vld [vmem:[#allocation2 + $0x30] sm:$0xff]
    %v47 = vld [vmem:[#allocation2 + $0x38] sm:$0xff]
    %v48 = vld [vmem:[#allocation2 + $0x40] sm:$0xff]
    %v49 = vld [vmem:[#allocation2 + $0x48] sm:$0xff]
    %v50 = vld [vmem:[#allocation2 + $0x50] sm:$0xff]
    %v51 = vld [vmem:[#allocation2 + $0x58] sm:$0xff]
    %v52 = vld [vmem:[#allocation2 + $0x60] sm:$0xff]
    %v53 = vld [vmem:[#allocation2 + $0x68] sm:$0xff]
    %v54 = vld [vmem:[#allocation2 + $0x70] sm:$0xff]
    %v55 = vld [vmem:[#allocation2 + $0x78] sm:$0xff]
    %v56 = vld [vmem:[#allocation2 + $0x80] sm:$0xff]
    %v57 = vld [vmem:[#allocation2 + $0x88] sm:$0xff]
    %v58 = vld [vmem:[#allocation2 + $0x90] sm:$0xff]
    %v59 = vld [vmem:[#allocation2 + $0x98] sm:$0xff]
    %v60 = vld [vmem:[#allocation5] sm:$0xff]
    %v61 = vld [vmem:[#allocation5 + $0x8] sm:$0xff]
    %v62 = vld [vmem:[#allocation5 + $0x10] sm:$0xff]
    %v63 = vld [vmem:[#allocation5 + $0x18] sm:$0xff]
    %v64 = vld [vmem:[#allocation5 + $0x20] sm:$0xff]
    %v65 = vld [vmem:[#allocation5 + $0x28] sm:$0xff]
    %v66 = vld [vmem:[#allocation5 + $0x30] sm:$0xff]
    %v67 = vld [vmem:[#allocation5 + $0x38] sm:$0xff]
    %v68 = vld [vmem:[#allocation5 + $0x40] sm:$0xff]
    %v69 = vld [vmem:[#allocation5 + $0x48] sm:$0xff]
    %v70 = vld [vmem:[#allocation5 + $0x50] sm:$0xff]
    %v71 = vld [vmem:[#allocation5 + $0x58] sm:$0xff]
    %v72 = vld [vmem:[#allocation5 + $0x60] sm:$0xff]
    %v73 = vld [vmem:[#allocation5 + $0x68] sm:$0xff]
    %v74 = vld [vmem:[#allocation5 + $0x70] sm:$0xff]
    %v75 = vld [vmem:[#allocation5 + $0x78] sm:$0xff]
    %v76 = vld [vmem:[#allocation5 + $0x80] sm:$0xff]
    %v77 = vld [vmem:[#allocation5 + $0x88] sm:$0xff]
    %v78 = vld [vmem:[#allocation5 + $0x90] sm:$0xff]
    %v79 = vld [vmem:[#allocation5 + $0x98] sm:$0xff]
    %v80 = vadd.f32 %v40, %v60
    %v81 = vadd.f32 %v41, %v61
    %v82 = vadd.f32 %v42, %v62
    %v83 = vadd.f32 %v43, %v63
    %v84 = vadd.f32 %v44, %v64
    %v85 = vadd.f32 %v45, %v65
    %v86 = vadd.f32 %v46, %v66
    %v87 = vadd.f32 %v47, %v67
    %v88 = vadd.f32 %v48, %v68
    %v89 = vadd.f32 %v49, %v69
    %v90 = vadd.f32 %v50, %v70
    %v91 = vadd.f32 %v51, %v71
    %v92 = vadd.f32 %v52, %v72
    %v93 = vadd.f32 %v53, %v73
    %v94 = vadd.f32 %v54, %v74
    %v95 = vadd.f32 %v55, %v75
    %v96 = vadd.f32 %v56, %v76
    %v97 = vadd.f32 %v57, %v77
    %v98 = vadd.f32 %v58, %v78
    %v99 = vadd.f32 %v59, %v79
    %100 = vst [vmem:[#allocation7] sm:$0xff] %v80
    %101 = vst [vmem:[#allocation7 + $0x8] sm:$0xff] %v81
    %102 = vst [vmem:[#allocation7 + $0x10] sm:$0xff] %v82
    %103 = vst [vmem:[#allocation7 + $0x18] sm:$0xff] %v83
    %104 = vst [vmem:[#allocation7 + $0x20] sm:$0xff] %v84
    %105 = vst [vmem:[#allocation7 + $0x28] sm:$0xff] %v85
    %106 = vst [vmem:[#allocation7 + $0x30] sm:$0xff] %v86
    %107 = vst [vmem:[#allocation7 + $0x38] sm:$0xff] %v87
    %108 = vst [vmem:[#allocation7 + $0x40] sm:$0xff] %v88
    %109 = vst [vmem:[#allocation7 + $0x48] sm:$0xff] %v89
    %110 = vst [vmem:[#allocation7 + $0x50] sm:$0xff] %v90
    %111 = vst [vmem:[#allocation7 + $0x58] sm:$0xff] %v91
    %112 = vst [vmem:[#allocation7 + $0x60] sm:$0xff] %v92
    %113 = vst [vmem:[#allocation7 + $0x68] sm:$0xff] %v93
    %114 = vst [vmem:[#allocation7 + $0x70] sm:$0xff] %v94
    %115 = vst [vmem:[#allocation7 + $0x78] sm:$0xff] %v95
    %116 = vst [vmem:[#allocation7 + $0x80] sm:$0xff] %v96
    %117 = vst [vmem:[#allocation7 + $0x88] sm:$0xff] %v97
    %118 = vst [vmem:[#allocation7 + $0x90] sm:$0xff] %v98
    %vm119 = vcmask 146432
    %120 = vst.msk [vmem:[#allocation7 + $0x98] sm:$0xff] %vm119, %v99
    // Predicated region
    $region18: #{tpu_custom_call.1} parent=1 // pred_check
      _
    $region19: #{tpu_custom_call.1} parent=1 // pred_check_branch
      %122 = sbr.rel (0) target = $region21
    $region20: #{tpu_custom_call.1} parent=1 // pred_region
      %124 = vsyncadd [#allocation4], 0
      %s126 = sshll.u32 [#allocation7], 4
      %s127 = int_to_ptr.vmem [resolvable:$true] %s126
      %s128 = sshll.u32 %s2, 4
      %s129 = int_to_ptr.hbm [resolvable:$true] %s128
      %131 = dma.vmem_to_hbm [thread:$0]  %s127, 2560, %s129, [#allocation4]
    $region21: #{tpu_custom_call.1} parent=1 // pred_fallthru
      _
    // Predicated region
    $region22: #{tpu_custom_call.1} parent=1 // pred_check
      _
    $region23: #{tpu_custom_call.1} parent=1 // pred_check_branch
      %133 = sbr.rel (0) target = $region25
    $region24: #{tpu_custom_call.1} parent=1 // pred_region
      %135 = dma.done [#allocation4], 2560
    $region25: #{tpu_custom_call.1} parent=1 // pred_fallthru
      _
    %136 = vsyncpa [#allocation3], 1
    %137 = vsyncpa [#allocation6], 1
    %138 = vsyncpa [#allocation4], 1

</llo_original>
